<compile_context>
chip_gen: v7x
topology: tpu7x:2x2x1
jax: 0.10.0
libtpu: 0.0.40
codegen_flags: <defaults>
</compile_context>

<pallas_src>
import math

import jax
import jax.numpy as jnp
import numpy as np
from jax.experimental import pallas as pl
from jax.experimental.pallas import tpu as pltpu

# ------------------------- small synthetic "cfg" -------------------------
VOCAB_SIZE = 50
EMBED_DIM = 32               # cfg.embedding_dim
NUM_FILTERS = 16             # cfg.num_filters
FILTER_SIZES = (2, 3, 4)     # cfg.filter_sizes
NUM_CLASSES = 5              # cfg.num_classes
NUM_HEADS = 4                # hardcoded in the module
SEQ_LEN = 16
BATCH = 2
FEAT_DIM = NUM_FILTERS * len(FILTER_SIZES)   # 48
HEAD_DIM = FEAT_DIM // NUM_HEADS             # 12


# --------------------- the single fused forward kernel ---------------------
def _textcnn_fused_kernel(tok_ref, emb_ref, w2_ref, w3_ref, w4_ref,
                          cb_ref, wf_ref, bf_ref, out_ref):
    # tok_ref : (B*L, 1) int32            emb_ref : (V, E) embedding table
    # wK_ref  : (k*E, F) im2col-flattened conv weight per filter size k
    # cb_ref  : (1, 3*F) concatenated conv biases
    # wf_ref  : (D, C) pre-folded v_proj @ out_proj @ fc      bf_ref : (1, C)
    # out_ref : (B, C)
    B, L, V, F = BATCH, SEQ_LEN, VOCAB_SIZE, NUM_FILTERS

    # 1) Embedding lookup as one-hot @ table on the MXU (replaces XLA gather).
    tok = tok_ref[...]                                             # (B*L, 1)
    vocab_ids = jax.lax.broadcasted_iota(jnp.int32, (B * L, V), 1)
    onehot = (tok == vocab_ids).astype(jnp.float32)                # (B*L, V)
    emb = jnp.dot(onehot, emb_ref[...],
                  preferred_element_type=jnp.float32)              # (B*L, E)

    conv_b = cb_ref[...]                                           # (1, 3F)
    w_refs = (w2_ref, w3_ref, w4_ref)

    # 2) Conv branches: im2col (taps folded into K, batch folded into rows)
    #    -> one matmul per branch -> +bias -> ReLU -> global max over time.
    branch_feats = []
    for i, k in enumerate(FILTER_SIZES):
        l_out = L - k + 1
        windows = []
        for b in range(B):                       # static unroll, B == 2
            o = b * L
            windows.append(jnp.concatenate(
                [emb[o + t:o + t + l_out, :] for t in range(k)], axis=1))
        x = jnp.concatenate(windows, axis=0)                       # (B*l_out, k*E)
        h = jnp.dot(x, w_refs[i][...],
                    preferred_element_type=jnp.float32)            # (B*l_out, F)
        h = jnp.maximum(h + conv_b[:, i * F:(i + 1) * F], 0.0)     # +bias, ReLU
        pooled = jnp.concatenate(
            [jnp.max(h[b * l_out:(b + 1) * l_out, :], axis=0, keepdims=True)
             for b in range(B)], axis=0)                           # (B, F)
        branch_feats.append(pooled)

    feats = jnp.concatenate(branch_feats, axis=1)                  # (B, D)

    # 3) Dropout == identity (inference).  Single-token MHA + out_proj + fc are
    #    pre-folded into one matmul (context == v for a length-1 key axis).
    out_ref[...] = jnp.dot(feats, wf_ref[...],
                           preferred_element_type=jnp.float32) + bf_ref[...]


@jax.jit
def textcnn_forward(tokens, kp):
    vmem = pl.BlockSpec(memory_space=pltpu.MemorySpace.VMEM)
    tok = tokens.reshape(BATCH * SEQ_LEN, 1).astype(jnp.int32)
    args = (tok, kp["embedding"],
            kp["conv_w_flat"][0], kp["conv_w_flat"][1], kp["conv_w_flat"][2],
            kp["conv_b_cat"], kp["w_fused"], kp["b_fused"])
    return pl.pallas_call(
        _textcnn_fused_kernel,
        out_shape=jax.ShapeDtypeStruct((BATCH, NUM_CLASSES), jnp.float32),
        in_specs=[vmem] * len(args),
        out_specs=vmem,
    )(*args)


# ------------------------- deterministic parameters -------------------------
def init_params(key):
    keys = jax.random.split(key, 16)
    p = {}
    p["embedding"] = jax.random.normal(keys[0], (VOCAB_SIZE, EMBED_DIM), jnp.float32)
    p["conv_w"], p["conv_b"] = [], []
    for i, k in enumerate(FILTER_SIZES):
        # PyTorch Conv1d weight is (F, E, k); stored here as (k, E, F).
        w = 0.1 * jax.random.normal(keys[1 + i], (k, EMBED_DIM, NUM_FILTERS), jnp.float32)
        b = 0.1 * jax.random.normal(keys[4 + i], (1, NUM_FILTERS), jnp.float32)
        p["conv_w"].append(w)
        p["conv_b"].append(b)
    D = FEAT_DIM
    # MultiheadAttention in_proj rows (q/k/v), stored transposed (x @ WT form).
    p["wqT"] = 0.1 * jax.random.normal(keys[7], (D, D), jnp.float32)
    p["wkT"] = 0.1 * jax.random.normal(keys[8], (D, D), jnp.float32)
    p["wvT"] = 0.1 * jax.random.normal(keys[9], (D, D), jnp.float32)
    p["bq"] = 0.1 * jax.random.normal(keys[10], (1, D), jnp.float32)
    p["bk"] = 0.1 * jax.random.normal(keys[11], (1, D), jnp.float32)
    p["bv"] = 0.1 * jax.random.normal(keys[12], (1, D), jnp.float32)
    p["woT"] = 0.1 * jax.random.normal(keys[13], (D, D), jnp.float32)
    p["bo"] = jnp.zeros((1, D), jnp.float32)   # PyTorch out_proj bias init = 0
    p["wfcT"] = 0.1 * jax.random.normal(keys[14], (D, NUM_CLASSES), jnp.float32)
    p["bfc"] = 0.1 * jax.random.normal(keys[15], (1, NUM_CLASSES), jnp.float32)
    return p


def prepare_kernel_params(p):
    """Host-side pre-folding / re-layout of parameters for the fused kernel."""
    kp = {"embedding": p["embedding"]}
    # im2col weight layout: taps stacked along K -> (k*E, F).
    kp["conv_w_flat"] = [w.reshape(-1, NUM_FILTERS) for w in p["conv_w"]]
    kp["conv_b_cat"] = jnp.concatenate(p["conv_b"], axis=1)        # (1, 3F)
    # seq_len == 1 => softmax over the single key is 1 => attention context == v,
    # so fc(out_proj(v_proj(x))) == x @ (WvT WoT WfcT) + folded bias (inference only).
    kp["w_fused"] = p["wvT"] @ p["woT"] @ p["wfcT"]                # (D, C)
    kp["b_fused"] = (p["bv"] @ p["woT"] + p["bo"]) @ p["wfcT"] + p["bfc"]  # (1, C)
    return kp


# ------------------------- pure-JAX reference check -------------------------
def reference_forward(tokens, p):
    emb = jnp.take(p["embedding"], tokens, axis=0)                 # (B, L, E)
    pooled = []
    for i, k in enumerate(FILTER_SIZES):
        w = p["conv_w"][i]
        l_out = SEQ_LEN - k + 1
        out = jnp.zeros((BATCH, l_out, NUM_FILTERS), jnp.float32)
        for t in range(k):
            out = out + jnp.einsum("ble,ef->blf", emb[:, t:t + l_out, :], w[t])
        out = jax.nn.relu(out + p["conv_b"][i][0])
        pooled.append(jnp.max(out, axis=1))
    feats = jnp.concatenate(pooled, axis=1)                        # (B, D)
    # Full single-token MultiheadAttention (seq_len == 1), then fc.
    q = feats @ p["wqT"] + p["bq"]
    kk = feats @ p["wkT"] + p["bk"]
    v = feats @ p["wvT"] + p["bv"]
    qh = q.reshape(BATCH, NUM_HEADS, HEAD_DIM)
    kh = kk.reshape(BATCH, NUM_HEADS, HEAD_DIM)
    vh = v.reshape(BATCH, NUM_HEADS, HEAD_DIM)
    scores = (qh * kh).sum(-1, keepdims=True) / math.sqrt(HEAD_DIM)  # (B, H, 1)
    attn_w = jax.nn.softmax(scores, axis=-1)                         # == 1
    ctx = (attn_w * vh).reshape(BATCH, FEAT_DIM)
    attn_out = ctx @ p["woT"] + p["bo"]
    return attn_out @ p["wfcT"] + p["bfc"]


if __name__ == "__main__":
    key = jax.random.PRNGKey(0)
    pkey, tkey = jax.random.split(key)
    params = init_params(pkey)
    kparams = prepare_kernel_params(params)
    tokens = jax.random.randint(tkey, (BATCH, SEQ_LEN), 0, VOCAB_SIZE, dtype=jnp.int32)

    out = jax.block_until_ready(textcnn_forward(tokens, kparams))
    ref = jax.block_until_ready(reference_forward(tokens, params))

    assert out.shape == (BATCH, NUM_CLASSES), out.shape
    np.testing.assert_allclose(np.asarray(out), np.asarray(ref), rtol=1e-2, atol=1e-3)
    print("KERNEL_OK")
</pallas_src>

<mosaic_0001>
module attributes {stable_mosaic.version = 11 : i64} {
  func.func @_textcnn_fused_kernel(%arg0: memref<32x1xi32, #tpu.memory_space<vmem>>, %arg1: memref<50x32xf32, #tpu.memory_space<vmem>>, %arg2: memref<64x16xf32, #tpu.memory_space<vmem>>, %arg3: memref<96x16xf32, #tpu.memory_space<vmem>>, %arg4: memref<128x16xf32, #tpu.memory_space<vmem>>, %arg5: memref<1x48xf32, #tpu.memory_space<vmem>>, %arg6: memref<48x5xf32, #tpu.memory_space<vmem>>, %arg7: memref<1x5xf32, #tpu.memory_space<vmem>>, %arg8: memref<2x5xf32, #tpu.memory_space<vmem>>) attributes {dimension_semantics = [], scalar_prefetch = 0 : i64, scratch_operands = 0 : i64, tpu.core_type = #tpu.core_type<tc>} {
    %c0 = arith.constant 0 : index
    %c0_0 = arith.constant 0 : index
    %0 = vector.load %arg0[%c0, %c0_0] : memref<32x1xi32, #tpu.memory_space<vmem>>, vector<32x1xi32>
    %1 = tpu.iota {dimensions = array<i32: 1>} : vector<32x50xi32>
    %2 = vector.broadcast %0 : vector<32x1xi32> to vector<32x50xi32>
    %3 = arith.cmpi eq, %2, %1 : vector<32x50xi32>
    %4 = arith.extui %3 : vector<32x50xi1> to vector<32x50xi32>
    %5 = arith.sitofp %4 : vector<32x50xi32> to vector<32x50xf32>
    %c0_1 = arith.constant 0 : index
    %c0_2 = arith.constant 0 : index
    %6 = vector.load %arg1[%c0_1, %c0_2] : memref<50x32xf32, #tpu.memory_space<vmem>>, vector<50x32xf32>
    %cst = arith.constant dense<0.000000e+00> : vector<32x32xf32>
    %7 = tpu.matmul %5, %6, %cst {dimension_numbers = #tpu.dot_dimension_numbers<[1], [0], [0], [1], [0, 0, 1, 1], [], []>} : vector<32x50xf32>, vector<50x32xf32>, vector<32x32xf32> -> vector<32x32xf32>
    %c0_3 = arith.constant 0 : index
    %c0_4 = arith.constant 0 : index
    %8 = vector.load %arg5[%c0_3, %c0_4] : memref<1x48xf32, #tpu.memory_space<vmem>>, vector<1x48xf32>
    %9 = vector.extract_strided_slice %7 {offsets = [0, 0], sizes = [15, 32], strides = [1, 1]} : vector<32x32xf32> to vector<15x32xf32>
    %10 = vector.extract_strided_slice %7 {offsets = [1, 0], sizes = [15, 32], strides = [1, 1]} : vector<32x32xf32> to vector<15x32xf32>
    %11 = tpu.concatenate %9, %10 in 1 : vector<15x32xf32>, vector<15x32xf32> -> vector<15x64xf32>
    %12 = vector.extract_strided_slice %7 {offsets = [16, 0], sizes = [15, 32], strides = [1, 1]} : vector<32x32xf32> to vector<15x32xf32>
    %13 = vector.extract_strided_slice %7 {offsets = [17, 0], sizes = [15, 32], strides = [1, 1]} : vector<32x32xf32> to vector<15x32xf32>
    %14 = tpu.concatenate %12, %13 in 1 : vector<15x32xf32>, vector<15x32xf32> -> vector<15x64xf32>
    %15 = tpu.concatenate %11, %14 in 0 : vector<15x64xf32>, vector<15x64xf32> -> vector<30x64xf32>
    %c0_5 = arith.constant 0 : index
    %c0_6 = arith.constant 0 : index
    %16 = vector.load %arg2[%c0_5, %c0_6] : memref<64x16xf32, #tpu.memory_space<vmem>>, vector<64x16xf32>
    %cst_7 = arith.constant dense<0.000000e+00> : vector<30x16xf32>
    %17 = tpu.matmul %15, %16, %cst_7 {dimension_numbers = #tpu.dot_dimension_numbers<[1], [0], [0], [1], [0, 0, 1, 1], [], []>} : vector<30x64xf32>, vector<64x16xf32>, vector<30x16xf32> -> vector<30x16xf32>
    %18 = vector.extract_strided_slice %8 {offsets = [0, 0], sizes = [1, 16], strides = [1, 1]} : vector<1x48xf32> to vector<1x16xf32>
    %19 = vector.broadcast %18 : vector<1x16xf32> to vector<30x16xf32>
    %20 = arith.addf %17, %19 : vector<30x16xf32>
    %cst_8 = arith.constant 0.000000e+00 : f32
    %21 = vector.broadcast %cst_8 : f32 to vector<30x16xf32>
    %22 = arith.maximumf %20, %21 : vector<30x16xf32>
    %23 = vector.extract_strided_slice %22 {offsets = [0, 0], sizes = [15, 16], strides = [1, 1]} : vector<30x16xf32> to vector<15x16xf32>
    %cst_9 = arith.constant dense<0xFF800000> : vector<16xf32>
    %24 = vector.multi_reduction <maximumf>, %23, %cst_9 [0] : vector<15x16xf32> to vector<16xf32>
    %25 = vector.shape_cast %24 : vector<16xf32> to vector<1x16xf32>
    %26 = vector.extract_strided_slice %22 {offsets = [15, 0], sizes = [15, 16], strides = [1, 1]} : vector<30x16xf32> to vector<15x16xf32>
    %cst_10 = arith.constant dense<0xFF800000> : vector<16xf32>
    %27 = vector.multi_reduction <maximumf>, %26, %cst_10 [0] : vector<15x16xf32> to vector<16xf32>
    %28 = vector.shape_cast %27 : vector<16xf32> to vector<1x16xf32>
    %29 = tpu.concatenate %25, %28 in 0 : vector<1x16xf32>, vector<1x16xf32> -> vector<2x16xf32>
    %30 = vector.extract_strided_slice %7 {offsets = [0, 0], sizes = [14, 32], strides = [1, 1]} : vector<32x32xf32> to vector<14x32xf32>
    %31 = vector.extract_strided_slice %7 {offsets = [1, 0], sizes = [14, 32], strides = [1, 1]} : vector<32x32xf32> to vector<14x32xf32>
    %32 = vector.extract_strided_slice %7 {offsets = [2, 0], sizes = [14, 32], strides = [1, 1]} : vector<32x32xf32> to vector<14x32xf32>
    %33 = tpu.concatenate %30, %31, %32 in 1 : vector<14x32xf32>, vector<14x32xf32>, vector<14x32xf32> -> vector<14x96xf32>
    %34 = vector.extract_strided_slice %7 {offsets = [16, 0], sizes = [14, 32], strides = [1, 1]} : vector<32x32xf32> to vector<14x32xf32>
    %35 = vector.extract_strided_slice %7 {offsets = [17, 0], sizes = [14, 32], strides = [1, 1]} : vector<32x32xf32> to vector<14x32xf32>
    %36 = vector.extract_strided_slice %7 {offsets = [18, 0], sizes = [14, 32], strides = [1, 1]} : vector<32x32xf32> to vector<14x32xf32>
    %37 = tpu.concatenate %34, %35, %36 in 1 : vector<14x32xf32>, vector<14x32xf32>, vector<14x32xf32> -> vector<14x96xf32>
    %38 = tpu.concatenate %33, %37 in 0 : vector<14x96xf32>, vector<14x96xf32> -> vector<28x96xf32>
    %c0_11 = arith.constant 0 : index
    %c0_12 = arith.constant 0 : index
    %39 = vector.load %arg3[%c0_11, %c0_12] : memref<96x16xf32, #tpu.memory_space<vmem>>, vector<96x16xf32>
    %cst_13 = arith.constant dense<0.000000e+00> : vector<28x16xf32>
    %40 = tpu.matmul %38, %39, %cst_13 {dimension_numbers = #tpu.dot_dimension_numbers<[1], [0], [0], [1], [0, 0, 1, 1], [], []>} : vector<28x96xf32>, vector<96x16xf32>, vector<28x16xf32> -> vector<28x16xf32>
    %41 = vector.extract_strided_slice %8 {offsets = [0, 16], sizes = [1, 16], strides = [1, 1]} : vector<1x48xf32> to vector<1x16xf32>
    %42 = vector.broadcast %41 : vector<1x16xf32> to vector<28x16xf32>
    %43 = arith.addf %40, %42 : vector<28x16xf32>
    %cst_14 = arith.constant 0.000000e+00 : f32
    %44 = vector.broadcast %cst_14 : f32 to vector<28x16xf32>
    %45 = arith.maximumf %43, %44 : vector<28x16xf32>
    %46 = vector.extract_strided_slice %45 {offsets = [0, 0], sizes = [14, 16], strides = [1, 1]} : vector<28x16xf32> to vector<14x16xf32>
    %cst_15 = arith.constant dense<0xFF800000> : vector<16xf32>
    %47 = vector.multi_reduction <maximumf>, %46, %cst_15 [0] : vector<14x16xf32> to vector<16xf32>
    %48 = vector.shape_cast %47 : vector<16xf32> to vector<1x16xf32>
    %49 = vector.extract_strided_slice %45 {offsets = [14, 0], sizes = [14, 16], strides = [1, 1]} : vector<28x16xf32> to vector<14x16xf32>
    %cst_16 = arith.constant dense<0xFF800000> : vector<16xf32>
    %50 = vector.multi_reduction <maximumf>, %49, %cst_16 [0] : vector<14x16xf32> to vector<16xf32>
    %51 = vector.shape_cast %50 : vector<16xf32> to vector<1x16xf32>
    %52 = tpu.concatenate %48, %51 in 0 : vector<1x16xf32>, vector<1x16xf32> -> vector<2x16xf32>
    %53 = vector.extract_strided_slice %7 {offsets = [0, 0], sizes = [13, 32], strides = [1, 1]} : vector<32x32xf32> to vector<13x32xf32>
    %54 = vector.extract_strided_slice %7 {offsets = [1, 0], sizes = [13, 32], strides = [1, 1]} : vector<32x32xf32> to vector<13x32xf32>
    %55 = vector.extract_strided_slice %7 {offsets = [2, 0], sizes = [13, 32], strides = [1, 1]} : vector<32x32xf32> to vector<13x32xf32>
    %56 = vector.extract_strided_slice %7 {offsets = [3, 0], sizes = [13, 32], strides = [1, 1]} : vector<32x32xf32> to vector<13x32xf32>
    %57 = tpu.concatenate %53, %54, %55, %56 in 1 : vector<13x32xf32>, vector<13x32xf32>, vector<13x32xf32>, vector<13x32xf32> -> vector<13x128xf32>
    %58 = vector.extract_strided_slice %7 {offsets = [16, 0], sizes = [13, 32], strides = [1, 1]} : vector<32x32xf32> to vector<13x32xf32>
    %59 = vector.extract_strided_slice %7 {offsets = [17, 0], sizes = [13, 32], strides = [1, 1]} : vector<32x32xf32> to vector<13x32xf32>
    %60 = vector.extract_strided_slice %7 {offsets = [18, 0], sizes = [13, 32], strides = [1, 1]} : vector<32x32xf32> to vector<13x32xf32>
    %61 = vector.extract_strided_slice %7 {offsets = [19, 0], sizes = [13, 32], strides = [1, 1]} : vector<32x32xf32> to vector<13x32xf32>
    %62 = tpu.concatenate %58, %59, %60, %61 in 1 : vector<13x32xf32>, vector<13x32xf32>, vector<13x32xf32>, vector<13x32xf32> -> vector<13x128xf32>
    %63 = tpu.concatenate %57, %62 in 0 : vector<13x128xf32>, vector<13x128xf32> -> vector<26x128xf32>
    %c0_17 = arith.constant 0 : index
    %c0_18 = arith.constant 0 : index
    %64 = vector.load %arg4[%c0_17, %c0_18] : memref<128x16xf32, #tpu.memory_space<vmem>>, vector<128x16xf32>
    %cst_19 = arith.constant dense<0.000000e+00> : vector<26x16xf32>
    %65 = tpu.matmul %63, %64, %cst_19 {dimension_numbers = #tpu.dot_dimension_numbers<[1], [0], [0], [1], [0, 0, 1, 1], [], []>} : vector<26x128xf32>, vector<128x16xf32>, vector<26x16xf32> -> vector<26x16xf32>
    %66 = vector.extract_strided_slice %8 {offsets = [0, 32], sizes = [1, 16], strides = [1, 1]} : vector<1x48xf32> to vector<1x16xf32>
    %67 = vector.broadcast %66 : vector<1x16xf32> to vector<26x16xf32>
    %68 = arith.addf %65, %67 : vector<26x16xf32>
    %cst_20 = arith.constant 0.000000e+00 : f32
    %69 = vector.broadcast %cst_20 : f32 to vector<26x16xf32>
    %70 = arith.maximumf %68, %69 : vector<26x16xf32>
    %71 = vector.extract_strided_slice %70 {offsets = [0, 0], sizes = [13, 16], strides = [1, 1]} : vector<26x16xf32> to vector<13x16xf32>
    %cst_21 = arith.constant dense<0xFF800000> : vector<16xf32>
    %72 = vector.multi_reduction <maximumf>, %71, %cst_21 [0] : vector<13x16xf32> to vector<16xf32>
    %73 = vector.shape_cast %72 : vector<16xf32> to vector<1x16xf32>
    %74 = vector.extract_strided_slice %70 {offsets = [13, 0], sizes = [13, 16], strides = [1, 1]} : vector<26x16xf32> to vector<13x16xf32>
    %cst_22 = arith.constant dense<0xFF800000> : vector<16xf32>
    %75 = vector.multi_reduction <maximumf>, %74, %cst_22 [0] : vector<13x16xf32> to vector<16xf32>
    %76 = vector.shape_cast %75 : vector<16xf32> to vector<1x16xf32>
    %77 = tpu.concatenate %73, %76 in 0 : vector<1x16xf32>, vector<1x16xf32> -> vector<2x16xf32>
    %78 = tpu.concatenate %29, %52, %77 in 1 : vector<2x16xf32>, vector<2x16xf32>, vector<2x16xf32> -> vector<2x48xf32>
    %c0_23 = arith.constant 0 : index
    %c0_24 = arith.constant 0 : index
    %79 = vector.load %arg6[%c0_23, %c0_24] : memref<48x5xf32, #tpu.memory_space<vmem>>, vector<48x5xf32>
    %cst_25 = arith.constant dense<0.000000e+00> : vector<2x5xf32>
    %80 = tpu.matmul %78, %79, %cst_25 {dimension_numbers = #tpu.dot_dimension_numbers<[1], [0], [0], [1], [0, 0, 1, 1], [], []>} : vector<2x48xf32>, vector<48x5xf32>, vector<2x5xf32> -> vector<2x5xf32>
    %c0_26 = arith.constant 0 : index
    %c0_27 = arith.constant 0 : index
    %81 = vector.load %arg7[%c0_26, %c0_27] : memref<1x5xf32, #tpu.memory_space<vmem>>, vector<1x5xf32>
    %82 = vector.broadcast %81 : vector<1x5xf32> to vector<2x5xf32>
    %83 = arith.addf %80, %82 : vector<2x5xf32>
    %c0_28 = arith.constant 0 : index
    %c0_29 = arith.constant 0 : index
    %84 = vector.load %arg8[%c0_28, %c0_29] : memref<2x5xf32, #tpu.memory_space<vmem>>, vector<2x5xf32>
    tpu.vector_store %arg8[%c0_28, %c0_29], %83 {strides = array<i32>} : memref<2x5xf32, #tpu.memory_space<vmem>>, vector<2x5xf32>,
    return
  }
}

</mosaic_0001>

<llo_original>
// kernel: textcnn_forward.1
$region0: #{textcnn_forward.1}
  #allocation0 [shape = 'u32[]', space=smem, size = 0x4, offset = 0x4, fixed_abs, tag = 'smem constant byte address 0x4 - core index']
  #allocation1 [shape = 'u32[144,128]{1,0:T(1,128)}', space=vmem, size = 0x12000, scoped, tag = 'internal scratch']
  %s0 = inlined_call_operand.vmem [shape: s32[32,1], index: 0, kind: input, shape index: {}]
  %s1 = inlined_call_operand.vmem [shape: f32[50,32], index: 1, kind: input, shape index: {}]
  %s2 = inlined_call_operand.vmem [shape: f32[64,16], index: 2, kind: input, shape index: {}]
  %s3 = inlined_call_operand.vmem [shape: f32[96,16], index: 3, kind: input, shape index: {}]
  %s4 = inlined_call_operand.vmem [shape: f32[128,16], index: 4, kind: input, shape index: {}]
  %s5 = inlined_call_operand.vmem [shape: f32[1,48], index: 5, kind: input, shape index: {}]
  %s6 = inlined_call_operand.vmem [shape: f32[48,5], index: 6, kind: input, shape index: {}]
  %s7 = inlined_call_operand.vmem [shape: f32[1,5], index: 7, kind: input, shape index: {}]
  %s8 = inlined_call_operand.hbm [shape: f32[2,5], index: 8, kind: output, shape index: {}]
  %s9 = sld [smem:[#allocation0]]
  $region42: #{textcnn_forward.1} parent=0
    _
  %s11 = ssub.s32 1, %s9
  %s12 = scalar_select 0, %s11, %s9
  $region1: #{textcnn_forward.1} parent=0
    #allocation2 [shape = 'u8[1024]{0}', space=vmem, size = 0x400, scoped, tag = 'output window, operand 0, single buffered']
    #allocation3 [shape = 's32[1]{0}', space=sflag, size = 0x4, scoped, tag = 'scoped memory for textcnn_forward.1']
    %13 = vsyncpa [#allocation3], 0
    // Predicated region
    $region2: #{textcnn_forward.1} parent=1 // pred_check
      _
    $region3: #{textcnn_forward.1} parent=1 // pred_check_branch
      %15 = sbr.rel (0) target = $region5
    $region4: #{textcnn_forward.1} parent=1 // pred_region
      _
    $region5: #{textcnn_forward.1} parent=1 // pred_fallthru
      _
    // Predicated region
    $region6: #{textcnn_forward.1} parent=1 // pred_check
      _
    $region7: #{textcnn_forward.1} parent=1 // pred_check_branch
      %17 = sbr.rel (0) target = $region9
    $region8: #{textcnn_forward.1} parent=1 // pred_region
      _
    $region9: #{textcnn_forward.1} parent=1 // pred_fallthru
      _
    // Predicated region
    $region10: #{textcnn_forward.1} parent=1 // pred_check
      _
    $region11: #{textcnn_forward.1} parent=1 // pred_check_branch
      %19 = sbr.rel (0) target = $region13
    $region12: #{textcnn_forward.1} parent=1 // pred_region
      _
    $region13: #{textcnn_forward.1} parent=1 // pred_fallthru
      _
    // Predicated region
    $region14: #{textcnn_forward.1} parent=1 // pred_check
      _
    $region15: #{textcnn_forward.1} parent=1 // pred_check_branch
      %21 = sbr.rel (0) target = $region17
    $region16: #{textcnn_forward.1} parent=1 // pred_region
      _
    $region17: #{textcnn_forward.1} parent=1 // pred_fallthru
      _
    // Predicated region
    $region18: #{textcnn_forward.1} parent=1 // pred_check
      _
    $region19: #{textcnn_forward.1} parent=1 // pred_check_branch
      %23 = sbr.rel (0) target = $region21
    $region20: #{textcnn_forward.1} parent=1 // pred_region
      _
    $region21: #{textcnn_forward.1} parent=1 // pred_fallthru
      _
    // Predicated region
    $region22: #{textcnn_forward.1} parent=1 // pred_check
      _
    $region23: #{textcnn_forward.1} parent=1 // pred_check_branch
      %25 = sbr.rel (0) target = $region25
    $region24: #{textcnn_forward.1} parent=1 // pred_region
      _
    $region25: #{textcnn_forward.1} parent=1 // pred_fallthru
      _
    // Predicated region
    $region26: #{textcnn_forward.1} parent=1 // pred_check
      _
    $region27: #{textcnn_forward.1} parent=1 // pred_check_branch
      %27 = sbr.rel (0) target = $region29
    $region28: #{textcnn_forward.1} parent=1 // pred_region
      _
    $region29: #{textcnn_forward.1} parent=1 // pred_fallthru
      _
    // Predicated region
    $region30: #{textcnn_forward.1} parent=1 // pred_check
      _
    $region31: #{textcnn_forward.1} parent=1 // pred_check_branch
      %29 = sbr.rel (0) target = $region33
    $region32: #{textcnn_forward.1} parent=1 // pred_region
      _
    $region33: #{textcnn_forward.1} parent=1 // pred_fallthru
      _
    %v30 = vld [vmem:[%s0] sm:$0xff]
    %v31 = vld [vmem:[%s0 + $0x8] sm:$0xff]
    %v32 = vld [vmem:[%s0 + $0x10] sm:$0xff]
    %v33 = vld [vmem:[%s0 + $0x18] sm:$0xff]
    %v34 = vlaneseq
    %v35 = vand.u32 %v34, 127
    %36 = vset.pattern.permute.xlu0 0
    %37 = vperm.xlu0 %36, %v30
    %v38 = vpop.permute.xlu0 %37
    %39 = vset.pattern.permute.xlu0 0
    %40 = vperm.xlu0 %39, %v31
    %v41 = vpop.permute.xlu0 %40
    %42 = vset.pattern.permute.xlu0 0
    %43 = vperm.xlu0 %42, %v32
    %v44 = vpop.permute.xlu0 %43
    %45 = vset.pattern.permute.xlu0 0
    %46 = vperm.xlu0 %45, %v33
    %v47 = vpop.permute.xlu0 %46
    %vm48 = vcmp.eq.s32.totalorder %v38, %v35
    %vm49 = vcmp.eq.s32.totalorder %v41, %v35
    %vm50 = vcmp.eq.s32.totalorder %v44, %v35
    %vm51 = vcmp.eq.s32.totalorder %v47, %v35
    %v52 = vsel %vm48, 1, 0
    %v53 = vsel %vm49, 1, 0
    %v54 = vsel %vm50, 1, 0
    %v55 = vsel %vm51, 1, 0
    %v56 = vcvt.s32.f32 %v52
    %v57 = vcvt.s32.f32 %v53
    %v58 = vcvt.s32.f32 %v54
    %v59 = vcvt.s32.f32 %v55
    %v60 = vld [vmem:[%s1] sm:$0xff]
    %v61 = vld [vmem:[%s1 + $0x8] sm:$0xff]
    %v62 = vld [vmem:[%s1 + $0x10] sm:$0xff]
    %v63 = vld [vmem:[%s1 + $0x18] sm:$0xff]
    %v64 = vld [vmem:[%s1 + $0x20] sm:$0xff]
    %v65 = vld [vmem:[%s1 + $0x28] sm:$0xff]
    %v66 = vld [vmem:[%s1 + $0x30] sm:$0x3]
    %vm67 = vcmask 408576
    %v69 = vsel %vm67, %v56, 0
    %v72 = vsel %vm67, %v57, 0
    %v75 = vsel %vm67, %v58, 0
    %v78 = vsel %vm67, %v59, 0
    %vm80 = vcmask 1041408
    %v82 = vsel %vm80, %v66, 0
    %84 = vmatprep.subr.mxu0 0.0
    %85 = vmatpush1.msra.mxu0 %v60
    %86 = vmatprep.subr.mxu0 0.0
    %87 = vmatpush1.msra.mxu0 %v61
    %88 = vmatprep.subr.mxu0 0.0
    %89 = vmatpush1.msra.mxu0 %v62
    %90 = vmatprep.subr.mxu0 0.0
    %91 = vmatpush1.msra.mxu0 %v63
    %92 = vmatprep.subr.mxu0 0.0
    %93 = vmatpush1.msra.mxu0 %v64
    %94 = vmatprep.subr.mxu0 0.0
    %95 = vmatpush1.msra.mxu0 %v65
    %96 = vmatprep.subr.mxu0 0.0
    %97 = vmatpush1.msra.mxu0 %v82
    %98 = vmatprep.subr.mxu0 0.0
    %99 = vmatpush1.msra.mxu0 0.0
    %100 = vmatprep.subr.mxu0 0.0
    %101 = vmatpush1.msra.mxu0 0.0
    %102 = vmatprep.subr.mxu0 0.0
    %103 = vmatpush1.msra.mxu0 0.0
    %104 = vmatprep.subr.mxu0 0.0
    %105 = vmatpush1.msra.mxu0 0.0
    %106 = vmatprep.subr.mxu0 0.0
    %107 = vmatpush1.msra.mxu0 0.0
    %108 = vmatprep.subr.mxu0 0.0
    %109 = vmatpush1.msra.mxu0 0.0
    %110 = vmatprep.subr.mxu0 0.0
    %111 = vmatpush1.msra.mxu0 0.0
    %112 = vmatprep.subr.mxu0 0.0
    %113 = vmatpush1.msra.mxu0 0.0
    %114 = vmatprep.subr.mxu0 0.0
    %115 = vmatpush1.msra.mxu0 0.0
    %116 = vmatprep.subr.mxu0 0.0
    %117 = vmatpush1.msra.mxu0 0.0
    %118 = vmatprep.subr.mxu0 0.0
    %119 = vmatpush1.msra.mxu0 0.0
    %120 = vmatprep.subr.mxu0 0.0
    %121 = vmatpush1.msra.mxu0 0.0
    %122 = vmatprep.subr.mxu0 0.0
    %123 = vmatpush1.msra.mxu0 0.0
    %124 = vmatprep.subr.mxu0 0.0
    %125 = vmatpush1.msra.mxu0 0.0
    %126 = vmatprep.subr.mxu0 0.0
    %127 = vmatpush1.msra.mxu0 0.0
    %128 = vmatprep.subr.mxu0 0.0
    %129 = vmatpush1.msra.mxu0 0.0
    %130 = vmatprep.subr.mxu0 0.0
    %131 = vmatpush1.msra.mxu0 0.0
    %132 = vmatprep.subr.mxu0 0.0
    %133 = vmatpush1.msra.mxu0 0.0
    %134 = vmatprep.subr.mxu0 0.0
    %135 = vmatpush1.msra.mxu0 0.0
    %136 = vmatprep.subr.mxu0 0.0
    %137 = vmatpush1.msra.mxu0 0.0
    %138 = vmatprep.subr.mxu0 0.0
    %139 = vmatpush1.msra.mxu0 0.0
    %140 = vmatprep.subr.mxu0 0.0
    %141 = vmatpush1.msra.mxu0 0.0
    %142 = vmatprep.subr.mxu0 0.0
    %143 = vmatpush1.msra.mxu0 0.0
    %144 = vmatprep.subr.mxu0 0.0
    %145 = vmatpush1.msra.mxu0 0.0
    %146 = vmatprep.subr.mxu0 0.0
    %147 = vmatpush1.msra.mxu0 0.0
    %148 = vmatprep.mubr.f32.mxu0 0.0
    %149 = vmatmul.mubr.f32.gmra.mrb[0].mxu0 %v69
    %v150 = vpop.f32.mrb[0].mxu0
    %v151 = vadd.f32 0.0, %v150
    %v152 = vpop.f32.mrb[0].mxu0
    %153 = vmatprep.mubr.f32.mxu0 0.0
    %154 = vmatmul.mubr.f32.gmra.mrb[0].mxu0 %v72
    %v155 = vpop.f32.mrb[0].mxu0
    %v156 = vadd.f32 0.0, %v155
    %v157 = vpop.f32.mrb[0].mxu0
    %158 = vmatprep.mubr.f32.mxu0 0.0
    %159 = vmatmul.mubr.f32.gmra.mrb[0].mxu0 %v75
    %v160 = vpop.f32.mrb[0].mxu0
    %v161 = vadd.f32 0.0, %v160
    %v162 = vpop.f32.mrb[0].mxu0
    %163 = vmatprep.mubr.f32.mxu0 0.0
    %164 = vmatmul.mubr.f32.gmra.mrb[0].mxu0 %v78
    %v165 = vpop.f32.mrb[0].mxu0
    %v166 = vadd.f32 0.0, %v165
    %v167 = vpop.f32.mrb[0].mxu0
    %168 = vdwg.mxu0
    %v169 = vld [vmem:[%s5] sm:$0x1]
    %vm172 = vcmask 1046528
    %v173 = vrot.slane %v151, 1
    %v174 = vrot.slane %v156, 1
    %v175 = vsel %vm172, %v173, %v174
    %176 = vrot.lane.b32.xlu0 %v175, 32
    %v177 = vpop.permute.xlu0 %176
    %178 = vrot.lane.b32.xlu0 %v174, 32
    %v179 = vpop.permute.xlu0 %178
    %vm182 = vcmask 261120
    %v183 = vsel %vm182, %v151, %v177
    %v184 = vsel %vm182, %v156, %v179
    %v187 = vrot.slane %v161, 1
    %v188 = vrot.slane %v166, 1
    %v189 = vsel %vm172, %v187, %v188
    %190 = vrot.lane.b32.xlu0 %v189, 32
    %v191 = vpop.permute.xlu0 %190
    %192 = vrot.lane.b32.xlu0 %v188, 32
    %v193 = vpop.permute.xlu0 %192
    %v196 = vsel %vm182, %v161, %v191
    %v197 = vsel %vm182, %v166, %v193
    %v200 = vrot.slane %v196, 1
    %v201 = vrot.slane %v197, 1
    %v202 = vsel %vm172, %v200, %v201
    %v204 = vsel %vm172, %v184, %v200
    %v205 = vld [vmem:[%s2] sm:$0xff]
    %v206 = vld [vmem:[%s2 + $0x8] sm:$0xff]
    %v207 = vld [vmem:[%s2 + $0x10] sm:$0xff]
    %v208 = vld [vmem:[%s2 + $0x18] sm:$0xff]
    %v209 = vld [vmem:[%s2 + $0x20] sm:$0xff]
    %v210 = vld [vmem:[%s2 + $0x28] sm:$0xff]
    %v211 = vld [vmem:[%s2 + $0x30] sm:$0xff]
    %v212 = vld [vmem:[%s2 + $0x38] sm:$0xff]
    %v214 = vlaneseq
    %v215 = vshrl.u32 %v214, 7
    %v216 = vsub.s32 0, %v215
    %v217 = vrot.slane %v169, %v216
    %vm219 = vcmask 523264
    %v221 = vsel %vm219, %v183, 0
    %v224 = vsel %vm219, %v204, 0
    %v226 = vsel %vm219, %v202, 0
    %v228 = vsel %vm219, %v201, 0
    %230 = vmatprep.subr.mxu0 0.0
    %231 = vmatpush1.msra.mxu0 %v205
    %232 = vmatprep.subr.mxu0 0.0
    %233 = vmatpush1.msra.mxu0 %v206
    %234 = vmatprep.subr.mxu0 0.0
    %235 = vmatpush1.msra.mxu0 %v207
    %236 = vmatprep.subr.mxu0 0.0
    %237 = vmatpush1.msra.mxu0 %v208
    %238 = vmatprep.subr.mxu0 0.0
    %239 = vmatpush1.msra.mxu0 %v209
    %240 = vmatprep.subr.mxu0 0.0
    %241 = vmatpush1.msra.mxu0 %v210
    %242 = vmatprep.subr.mxu0 0.0
    %243 = vmatpush1.msra.mxu0 %v211
    %244 = vmatprep.subr.mxu0 0.0
    %245 = vmatpush1.msra.mxu0 %v212
    %246 = vmatprep.subr.mxu0 0.0
    %247 = vmatpush1.msra.mxu0 0.0
    %248 = vmatprep.subr.mxu0 0.0
    %249 = vmatpush1.msra.mxu0 0.0
    %250 = vmatprep.subr.mxu0 0.0
    %251 = vmatpush1.msra.mxu0 0.0
    %252 = vmatprep.subr.mxu0 0.0
    %253 = vmatpush1.msra.mxu0 0.0
    %254 = vmatprep.subr.mxu0 0.0
    %255 = vmatpush1.msra.mxu0 0.0
    %256 = vmatprep.subr.mxu0 0.0
    %257 = vmatpush1.msra.mxu0 0.0
    %258 = vmatprep.subr.mxu0 0.0
    %259 = vmatpush1.msra.mxu0 0.0
    %260 = vmatprep.subr.mxu0 0.0
    %261 = vmatpush1.msra.mxu0 0.0
    %262 = vmatprep.subr.mxu0 0.0
    %263 = vmatpush1.msra.mxu0 0.0
    %264 = vmatprep.subr.mxu0 0.0
    %265 = vmatpush1.msra.mxu0 0.0
    %266 = vmatprep.subr.mxu0 0.0
    %267 = vmatpush1.msra.mxu0 0.0
    %268 = vmatprep.subr.mxu0 0.0
    %269 = vmatpush1.msra.mxu0 0.0
    %270 = vmatprep.subr.mxu0 0.0
    %271 = vmatpush1.msra.mxu0 0.0
    %272 = vmatprep.subr.mxu0 0.0
    %273 = vmatpush1.msra.mxu0 0.0
    %274 = vmatprep.subr.mxu0 0.0
    %275 = vmatpush1.msra.mxu0 0.0
    %276 = vmatprep.subr.mxu0 0.0
    %277 = vmatpush1.msra.mxu0 0.0
    %278 = vmatprep.subr.mxu0 0.0
    %279 = vmatpush1.msra.mxu0 0.0
    %280 = vmatprep.subr.mxu0 0.0
    %281 = vmatpush1.msra.mxu0 0.0
    %282 = vmatprep.subr.mxu0 0.0
    %283 = vmatpush1.msra.mxu0 0.0
    %284 = vmatprep.subr.mxu0 0.0
    %285 = vmatpush1.msra.mxu0 0.0
    %286 = vmatprep.subr.mxu0 0.0
    %287 = vmatpush1.msra.mxu0 0.0
    %288 = vmatprep.subr.mxu0 0.0
    %289 = vmatpush1.msra.mxu0 0.0
    %290 = vmatprep.subr.mxu0 0.0
    %291 = vmatpush1.msra.mxu0 0.0
    %292 = vmatprep.subr.mxu0 0.0
    %293 = vmatpush1.msra.mxu0 0.0
    %294 = vmatprep.mubr.f32.mxu0 0.0
    %295 = vmatmul.mubr.f32.gmra.mrb[0].mxu0 %v221
    %v296 = vpop.f32.mrb[0].mxu0
    %v297 = vadd.f32 %v217, %v296
    %v298 = vpop.f32.mrb[0].mxu0
    %299 = vmatprep.mubr.f32.mxu0 0.0
    %300 = vmatmul.mubr.f32.gmra.mrb[0].mxu0 %v224
    %v301 = vpop.f32.mrb[0].mxu0
    %v302 = vadd.f32 %v217, %v301
    %v303 = vpop.f32.mrb[0].mxu0
    %304 = vmatprep.mubr.f32.mxu0 0.0
    %305 = vmatmul.mubr.f32.gmra.mrb[0].mxu0 %v226
    %v306 = vpop.f32.mrb[0].mxu0
    %v307 = vadd.f32 %v217, %v306
    %v308 = vpop.f32.mrb[0].mxu0
    %309 = vmatprep.mubr.f32.mxu0 0.0
    %310 = vmatmul.mubr.f32.gmra.mrb[0].mxu0 %v228
    %v311 = vpop.f32.mrb[0].mxu0
    %v312 = vadd.f32 %v217, %v311
    %v313 = vpop.f32.mrb[0].mxu0
    %314 = vdwg.mxu0
    %v315 = vmax.f32 %v297, 0.0
    %v316 = vmax.f32 %v302, 0.0
    %v317 = vmax.f32 %v307, 0.0
    %v318 = vmax.f32 %v312, 0.0
    %vm319 = vcmask 130048
    %v320 = vsel %vm319, %v315, -inf
    %vm321 = vcmask 129024
    %v322 = vsel %vm321, %v316, -inf
    %v323 = vmax.f32 %v320, %v322
    %v324 = vrot.slane %v323, 4
    %v325 = vmax.f32 %v323, %v324
    %v326 = vrot.slane %v325, 2
    %v327 = vmax.f32 %v325, %v326
    %v328 = vrot.slane %v327, 1
    %v329 = vmax.f32 %v327, %v328
    %vm330 = vcmask 130055
    %v331 = vsel %vm330, %v316, -inf
    %v332 = vsel %vm319, %v317, -inf
    %vm333 = vcmask 128000
    %v334 = vsel %vm333, %v318, -inf
    %v335 = vmax.f32 %v331, %v332
    %v336 = vmax.f32 %v335, %v334
    %v337 = vrot.slane %v336, 4
    %v338 = vmax.f32 %v336, %v337
    %v339 = vrot.slane %v338, 2
    %v340 = vmax.f32 %v338, %v339
    %v341 = vrot.slane %v340, 1
    %v342 = vmax.f32 %v340, %v341
    %vm343 = vcmask 1040384
    %v344 = vsel %vm343, %v329, %v342
    %vm345 = vcmask 1045504
    %v346 = vrot.slane %v151, 2
    %v347 = vrot.slane %v156, 2
    %v348 = vsel %vm345, %v346, %v347
    %349 = vrot.lane.b32.xlu0 %v348, 64
    %v350 = vpop.permute.xlu0 %349
    %351 = vrot.lane.b32.xlu0 %v347, 64
    %v352 = vpop.permute.xlu0 %351
    %v355 = vsel %vm219, %v183, %v350
    %v356 = vsel %vm219, %v184, %v352
    %v357 = vrot.slane %v161, 2
    %v358 = vrot.slane %v166, 2
    %v359 = vsel %vm345, %v357, %v358
    %360 = vrot.lane.b32.xlu0 %v359, 64
    %v361 = vpop.permute.xlu0 %360
    %362 = vrot.lane.b32.xlu0 %v358, 64
    %v363 = vpop.permute.xlu0 %362
    %v366 = vsel %vm219, %v196, %v361
    %v367 = vsel %vm219, %v197, %v363
    %v370 = vrot.slane %v366, 2
    %v371 = vrot.slane %v367, 2
    %v372 = vsel %vm345, %v370, %v371
    %v374 = vsel %vm345, %v356, %v370
    %v375 = vld [vmem:[%s3] sm:$0xff]
    %v376 = vld [vmem:[%s3 + $0x8] sm:$0xff]
    %v377 = vld [vmem:[%s3 + $0x10] sm:$0xff]
    %v378 = vld [vmem:[%s3 + $0x18] sm:$0xff]
    %v379 = vld [vmem:[%s3 + $0x20] sm:$0xff]
    %v380 = vld [vmem:[%s3 + $0x28] sm:$0xff]
    %v381 = vld [vmem:[%s3 + $0x30] sm:$0xff]
    %v382 = vld [vmem:[%s3 + $0x38] sm:$0xff]
    %v383 = vld [vmem:[%s3 + $0x40] sm:$0xff]
    %v384 = vld [vmem:[%s3 + $0x48] sm:$0xff]
    %v385 = vld [vmem:[%s3 + $0x50] sm:$0xff]
    %v386 = vld [vmem:[%s3 + $0x58] sm:$0xff]
    %387 = vrot.lane.b32.xlu0 %v217, 112
    %v388 = vpop.permute.xlu0 %387
    %vm390 = vcmask 785408
    %v392 = vsel %vm390, %v355, 0
    %v395 = vsel %vm390, %v374, 0
    %v397 = vsel %vm390, %v372, 0
    %v399 = vsel %vm390, %v371, 0
    %401 = vmatprep.subr.mxu0 0.0
    %402 = vmatpush1.msra.mxu0 %v375
    %403 = vmatprep.subr.mxu0 0.0
    %404 = vmatpush1.msra.mxu0 %v376
    %405 = vmatprep.subr.mxu0 0.0
    %406 = vmatpush1.msra.mxu0 %v377
    %407 = vmatprep.subr.mxu0 0.0
    %408 = vmatpush1.msra.mxu0 %v378
    %409 = vmatprep.subr.mxu0 0.0
    %410 = vmatpush1.msra.mxu0 %v379
    %411 = vmatprep.subr.mxu0 0.0
    %412 = vmatpush1.msra.mxu0 %v380
    %413 = vmatprep.subr.mxu0 0.0
    %414 = vmatpush1.msra.mxu0 %v381
    %415 = vmatprep.subr.mxu0 0.0
    %416 = vmatpush1.msra.mxu0 %v382
    %417 = vmatprep.subr.mxu0 0.0
    %418 = vmatpush1.msra.mxu0 %v383
    %419 = vmatprep.subr.mxu0 0.0
    %420 = vmatpush1.msra.mxu0 %v384
    %421 = vmatprep.subr.mxu0 0.0
    %422 = vmatpush1.msra.mxu0 %v385
    %423 = vmatprep.subr.mxu0 0.0
    %424 = vmatpush1.msra.mxu0 %v386
    %425 = vmatprep.subr.mxu0 0.0
    %426 = vmatpush1.msra.mxu0 0.0
    %427 = vmatprep.subr.mxu0 0.0
    %428 = vmatpush1.msra.mxu0 0.0
    %429 = vmatprep.subr.mxu0 0.0
    %430 = vmatpush1.msra.mxu0 0.0
    %431 = vmatprep.subr.mxu0 0.0
    %432 = vmatpush1.msra.mxu0 0.0
    %433 = vmatprep.subr.mxu0 0.0
    %434 = vmatpush1.msra.mxu0 0.0
    %435 = vmatprep.subr.mxu0 0.0
    %436 = vmatpush1.msra.mxu0 0.0
    %437 = vmatprep.subr.mxu0 0.0
    %438 = vmatpush1.msra.mxu0 0.0
    %439 = vmatprep.subr.mxu0 0.0
    %440 = vmatpush1.msra.mxu0 0.0
    %441 = vmatprep.subr.mxu0 0.0
    %442 = vmatpush1.msra.mxu0 0.0
    %443 = vmatprep.subr.mxu0 0.0
    %444 = vmatpush1.msra.mxu0 0.0
    %445 = vmatprep.subr.mxu0 0.0
    %446 = vmatpush1.msra.mxu0 0.0
    %447 = vmatprep.subr.mxu0 0.0
    %448 = vmatpush1.msra.mxu0 0.0
    %449 = vmatprep.subr.mxu0 0.0
    %450 = vmatpush1.msra.mxu0 0.0
    %451 = vmatprep.subr.mxu0 0.0
    %452 = vmatpush1.msra.mxu0 0.0
    %453 = vmatprep.subr.mxu0 0.0
    %454 = vmatpush1.msra.mxu0 0.0
    %455 = vmatprep.subr.mxu0 0.0
    %456 = vmatpush1.msra.mxu0 0.0
    %457 = vmatprep.subr.mxu0 0.0
    %458 = vmatpush1.msra.mxu0 0.0
    %459 = vmatprep.subr.mxu0 0.0
    %460 = vmatpush1.msra.mxu0 0.0
    %461 = vmatprep.subr.mxu0 0.0
    %462 = vmatpush1.msra.mxu0 0.0
    %463 = vmatprep.subr.mxu0 0.0
    %464 = vmatpush1.msra.mxu0 0.0
    %465 = vmatprep.mubr.f32.mxu0 0.0
    %466 = vmatmul.mubr.f32.gmra.mrb[0].mxu0 %v392
    %v467 = vpop.f32.mrb[0].mxu0
    %v468 = vadd.f32 %v388, %v467
    %v469 = vpop.f32.mrb[0].mxu0
    %470 = vmatprep.mubr.f32.mxu0 0.0
    %471 = vmatmul.mubr.f32.gmra.mrb[0].mxu0 %v395
    %v472 = vpop.f32.mrb[0].mxu0
    %v473 = vadd.f32 %v388, %v472
    %v474 = vpop.f32.mrb[0].mxu0
    %475 = vmatprep.mubr.f32.mxu0 0.0
    %476 = vmatmul.mubr.f32.gmra.mrb[0].mxu0 %v397
    %v477 = vpop.f32.mrb[0].mxu0
    %v478 = vadd.f32 %v388, %v477
    %v479 = vpop.f32.mrb[0].mxu0
    %480 = vmatprep.mubr.f32.mxu0 0.0
    %481 = vmatmul.mubr.f32.gmra.mrb[0].mxu0 %v399
    %v482 = vpop.f32.mrb[0].mxu0
    %v483 = vadd.f32 %v388, %v482
    %v484 = vpop.f32.mrb[0].mxu0
    %485 = vdwg.mxu0
    %v486 = vmax.f32 %v468, 0.0
    %v487 = vmax.f32 %v473, 0.0
    %v488 = vmax.f32 %v478, 0.0
    %v489 = vmax.f32 %v483, 0.0
    %v490 = vsel %vm319, %v486, -inf
    %v491 = vsel %vm333, %v487, -inf
    %v492 = vmax.f32 %v490, %v491
    %v493 = vrot.slane %v492, 4
    %v494 = vmax.f32 %v492, %v493
    %v495 = vrot.slane %v494, 2
    %v496 = vmax.f32 %v494, %v495
    %v497 = vrot.slane %v496, 1
    %v498 = vmax.f32 %v496, %v497
    %vm499 = vcmask 130054
    %v500 = vsel %vm499, %v487, -inf
    %v501 = vsel %vm319, %v488, -inf
    %vm502 = vcmask 125952
    %v503 = vsel %vm502, %v489, -inf
    %v504 = vmax.f32 %v500, %v501
    %v505 = vmax.f32 %v504, %v503
    %v506 = vrot.slane %v505, 4
    %v507 = vmax.f32 %v505, %v506
    %v508 = vrot.slane %v507, 2
    %v509 = vmax.f32 %v507, %v508
    %v510 = vrot.slane %v509, 1
    %v511 = vmax.f32 %v509, %v510
    %v512 = vsel %vm343, %v498, %v511
    %vm513 = vcmask 1044480
    %v514 = vrot.slane %v151, 3
    %v515 = vrot.slane %v156, 3
    %v516 = vsel %vm513, %v514, %v515
    %517 = vrot.lane.b32.xlu0 %v516, 96
    %v518 = vpop.permute.xlu0 %517
    %519 = vrot.lane.b32.xlu0 %v515, 96
    %v520 = vpop.permute.xlu0 %519
    %v523 = vsel %vm390, %v355, %v518
    %v524 = vsel %vm390, %v356, %v520
    %v525 = vrot.slane %v161, 3
    %v526 = vrot.slane %v166, 3
    %v527 = vsel %vm513, %v525, %v526
    %528 = vrot.lane.b32.xlu0 %v527, 96
    %v529 = vpop.permute.xlu0 %528
    %530 = vrot.lane.b32.xlu0 %v526, 96
    %v531 = vpop.permute.xlu0 %530
    %v534 = vsel %vm390, %v366, %v529
    %v535 = vsel %vm390, %v367, %v531
    %v538 = vrot.slane %v534, 3
    %v539 = vrot.slane %v535, 3
    %v540 = vsel %vm513, %v538, %v539
    %v544 = vsel %vm513, %v524, %v538
    %v545 = vld [vmem:[%s4] sm:$0xff]
    %v546 = vld [vmem:[%s4 + $0x8] sm:$0xff]
    %v547 = vld [vmem:[%s4 + $0x10] sm:$0xff]
    %v548 = vld [vmem:[%s4 + $0x18] sm:$0xff]
    %v549 = vld [vmem:[%s4 + $0x20] sm:$0xff]
    %v550 = vld [vmem:[%s4 + $0x28] sm:$0xff]
    %v551 = vld [vmem:[%s4 + $0x30] sm:$0xff]
    %v552 = vld [vmem:[%s4 + $0x38] sm:$0xff]
    %v553 = vld [vmem:[%s4 + $0x40] sm:$0xff]
    %v554 = vld [vmem:[%s4 + $0x48] sm:$0xff]
    %v555 = vld [vmem:[%s4 + $0x50] sm:$0xff]
    %v556 = vld [vmem:[%s4 + $0x58] sm:$0xff]
    %v557 = vld [vmem:[%s4 + $0x60] sm:$0xff]
    %v558 = vld [vmem:[%s4 + $0x68] sm:$0xff]
    %v559 = vld [vmem:[%s4 + $0x70] sm:$0xff]
    %v560 = vld [vmem:[%s4 + $0x78] sm:$0xff]
    %561 = vrot.lane.b32.xlu0 %v217, 96
    %v562 = vpop.permute.xlu0 %561
    %564 = vmatprep.subr.mxu0 0.0
    %565 = vmatpush1.msra.mxu0 %v545
    %566 = vmatprep.subr.mxu0 0.0
    %567 = vmatpush1.msra.mxu0 %v546
    %568 = vmatprep.subr.mxu0 0.0
    %569 = vmatpush1.msra.mxu0 %v547
    %570 = vmatprep.subr.mxu0 0.0
    %571 = vmatpush1.msra.mxu0 %v548
    %572 = vmatprep.subr.mxu0 0.0
    %573 = vmatpush1.msra.mxu0 %v549
    %574 = vmatprep.subr.mxu0 0.0
    %575 = vmatpush1.msra.mxu0 %v550
    %576 = vmatprep.subr.mxu0 0.0
    %577 = vmatpush1.msra.mxu0 %v551
    %578 = vmatprep.subr.mxu0 0.0
    %579 = vmatpush1.msra.mxu0 %v552
    %580 = vmatprep.subr.mxu0 0.0
    %581 = vmatpush1.msra.mxu0 %v553
    %582 = vmatprep.subr.mxu0 0.0
    %583 = vmatpush1.msra.mxu0 %v554
    %584 = vmatprep.subr.mxu0 0.0
    %585 = vmatpush1.msra.mxu0 %v555
    %586 = vmatprep.subr.mxu0 0.0
    %587 = vmatpush1.msra.mxu0 %v556
    %588 = vmatprep.subr.mxu0 0.0
    %589 = vmatpush1.msra.mxu0 %v557
    %590 = vmatprep.subr.mxu0 0.0
    %591 = vmatpush1.msra.mxu0 %v558
    %592 = vmatprep.subr.mxu0 0.0
    %593 = vmatpush1.msra.mxu0 %v559
    %594 = vmatprep.subr.mxu0 0.0
    %595 = vmatpush1.msra.mxu0 %v560
    %596 = vmatprep.subr.mxu0 0.0
    %597 = vmatpush1.msra.mxu0 0.0
    %598 = vmatprep.subr.mxu0 0.0
    %599 = vmatpush1.msra.mxu0 0.0
    %600 = vmatprep.subr.mxu0 0.0
    %601 = vmatpush1.msra.mxu0 0.0
    %602 = vmatprep.subr.mxu0 0.0
    %603 = vmatpush1.msra.mxu0 0.0
    %604 = vmatprep.subr.mxu0 0.0
    %605 = vmatpush1.msra.mxu0 0.0
    %606 = vmatprep.subr.mxu0 0.0
    %607 = vmatpush1.msra.mxu0 0.0
    %608 = vmatprep.subr.mxu0 0.0
    %609 = vmatpush1.msra.mxu0 0.0
    %610 = vmatprep.subr.mxu0 0.0
    %611 = vmatpush1.msra.mxu0 0.0
    %612 = vmatprep.subr.mxu0 0.0
    %613 = vmatpush1.msra.mxu0 0.0
    %614 = vmatprep.subr.mxu0 0.0
    %615 = vmatpush1.msra.mxu0 0.0
    %616 = vmatprep.subr.mxu0 0.0
    %617 = vmatpush1.msra.mxu0 0.0
    %618 = vmatprep.subr.mxu0 0.0
    %619 = vmatpush1.msra.mxu0 0.0
    %620 = vmatprep.subr.mxu0 0.0
    %621 = vmatpush1.msra.mxu0 0.0
    %622 = vmatprep.subr.mxu0 0.0
    %623 = vmatpush1.msra.mxu0 0.0
    %624 = vmatprep.subr.mxu0 0.0
    %625 = vmatpush1.msra.mxu0 0.0
    %626 = vmatprep.subr.mxu0 0.0
    %627 = vmatpush1.msra.mxu0 0.0
    %628 = vmatprep.mubr.f32.mxu0 0.0
    %629 = vmatmul.mubr.f32.gmra.mrb[0].mxu0 %v523
    %v630 = vpop.f32.mrb[0].mxu0
    %v631 = vadd.f32 %v562, %v630
    %v632 = vpop.f32.mrb[0].mxu0
    %633 = vmatprep.mubr.f32.mxu0 0.0
    %634 = vmatmul.mubr.f32.gmra.mrb[0].mxu0 %v544
    %v635 = vpop.f32.mrb[0].mxu0
    %v636 = vadd.f32 %v562, %v635
    %v637 = vpop.f32.mrb[0].mxu0
    %638 = vmatprep.mubr.f32.mxu0 0.0
    %639 = vmatmul.mubr.f32.gmra.mrb[0].mxu0 %v540
    %v640 = vpop.f32.mrb[0].mxu0
    %v641 = vadd.f32 %v562, %v640
    %v642 = vpop.f32.mrb[0].mxu0
    %643 = vmatprep.mubr.f32.mxu0 0.0
    %644 = vmatmul.mubr.f32.gmra.mrb[0].mxu0 %v539
    %v645 = vpop.f32.mrb[0].mxu0
    %v646 = vadd.f32 %v562, %v645
    %v647 = vpop.f32.mrb[0].mxu0
    %648 = vdwg.mxu0
    %v649 = vmax.f32 %v631, 0.0
    %v650 = vmax.f32 %v636, 0.0
    %v651 = vmax.f32 %v641, 0.0
    %v652 = vmax.f32 %v646, 0.0
    %v653 = vsel %vm319, %v649, -inf
    %vm654 = vcmask 126976
    %v655 = vsel %vm654, %v650, -inf
    %v656 = vmax.f32 %v653, %v655
    %v657 = vrot.slane %v656, 4
    %v658 = vmax.f32 %v656, %v657
    %v659 = vrot.slane %v658, 2
    %v660 = vmax.f32 %v658, %v659
    %v661 = vrot.slane %v660, 1
    %v662 = vmax.f32 %v660, %v661
    %vm663 = vcmask 130053
    %v664 = vsel %vm663, %v650, -inf
    %v665 = vsel %vm319, %v651, -inf
    %vm666 = vcmask 123904
    %v667 = vsel %vm666, %v652, -inf
    %v668 = vmax.f32 %v664, %v665
    %v669 = vmax.f32 %v668, %v667
    %v670 = vrot.slane %v669, 4
    %v671 = vmax.f32 %v669, %v670
    %v672 = vrot.slane %v671, 2
    %v673 = vmax.f32 %v671, %v672
    %v674 = vrot.slane %v673, 1
    %v675 = vmax.f32 %v673, %v674
    %v676 = vsel %vm343, %v662, %v675
    %678 = vrot.lane.b32.xlu0 %v512, 16
    %v679 = vpop.permute.xlu0 %678
    %682 = vrot.lane.b32.xlu0 %v676, 32
    %v683 = vpop.permute.xlu0 %682
    %v685 = vsel %vm319, %v344, %v679
    %v686 = vsel %vm182, %v685, %v683
    %v687 = vld [vmem:[%s6] sm:$0xff]
    %v688 = vld [vmem:[%s6 + $0x8] sm:$0xff]
    %v689 = vld [vmem:[%s6 + $0x10] sm:$0xff]
    %v690 = vld [vmem:[%s6 + $0x18] sm:$0xff]
    %v691 = vld [vmem:[%s6 + $0x20] sm:$0xff]
    %v692 = vld [vmem:[%s6 + $0x28] sm:$0xff]
    %v693 = vld [vmem:[%s7] sm:$0x1]
    %v695 = vlaneseq
    %v696 = vshrl.u32 %v695, 7
    %v697 = vsub.s32 0, %v696
    %v698 = vrot.slane %v693, %v697
    %vm700 = vcmask 392192
    %v702 = vsel %vm700, %v686, 0
    %704 = vmatprep.subr.mxu0 0.0
    %705 = vmatpush1.msra.mxu0 %v687
    %706 = vmatprep.subr.mxu0 0.0
    %707 = vmatpush1.msra.mxu0 %v688
    %708 = vmatprep.subr.mxu0 0.0
    %709 = vmatpush1.msra.mxu0 %v689
    %710 = vmatprep.subr.mxu0 0.0
    %711 = vmatpush1.msra.mxu0 %v690
    %712 = vmatprep.subr.mxu0 0.0
    %713 = vmatpush1.msra.mxu0 %v691
    %714 = vmatprep.subr.mxu0 0.0
    %715 = vmatpush1.msra.mxu0 %v692
    %716 = vmatprep.subr.mxu0 0.0
    %717 = vmatpush1.msra.mxu0 0.0
    %718 = vmatprep.subr.mxu0 0.0
    %719 = vmatpush1.msra.mxu0 0.0
    %720 = vmatprep.subr.mxu0 0.0
    %721 = vmatpush1.msra.mxu0 0.0
    %722 = vmatprep.subr.mxu0 0.0
    %723 = vmatpush1.msra.mxu0 0.0
    %724 = vmatprep.subr.mxu0 0.0
    %725 = vmatpush1.msra.mxu0 0.0
    %726 = vmatprep.subr.mxu0 0.0
    %727 = vmatpush1.msra.mxu0 0.0
    %728 = vmatprep.subr.mxu0 0.0
    %729 = vmatpush1.msra.mxu0 0.0
    %730 = vmatprep.subr.mxu0 0.0
    %731 = vmatpush1.msra.mxu0 0.0
    %732 = vmatprep.subr.mxu0 0.0
    %733 = vmatpush1.msra.mxu0 0.0
    %734 = vmatprep.subr.mxu0 0.0
    %735 = vmatpush1.msra.mxu0 0.0
    %736 = vmatprep.subr.mxu0 0.0
    %737 = vmatpush1.msra.mxu0 0.0
    %738 = vmatprep.subr.mxu0 0.0
    %739 = vmatpush1.msra.mxu0 0.0
    %740 = vmatprep.subr.mxu0 0.0
    %741 = vmatpush1.msra.mxu0 0.0
    %742 = vmatprep.subr.mxu0 0.0
    %743 = vmatpush1.msra.mxu0 0.0
    %744 = vmatprep.subr.mxu0 0.0
    %745 = vmatpush1.msra.mxu0 0.0
    %746 = vmatprep.subr.mxu0 0.0
    %747 = vmatpush1.msra.mxu0 0.0
    %748 = vmatprep.subr.mxu0 0.0
    %749 = vmatpush1.msra.mxu0 0.0
    %750 = vmatprep.subr.mxu0 0.0
    %751 = vmatpush1.msra.mxu0 0.0
    %752 = vmatprep.subr.mxu0 0.0
    %753 = vmatpush1.msra.mxu0 0.0
    %754 = vmatprep.subr.mxu0 0.0
    %755 = vmatpush1.msra.mxu0 0.0
    %756 = vmatprep.subr.mxu0 0.0
    %757 = vmatpush1.msra.mxu0 0.0
    %758 = vmatprep.subr.mxu0 0.0
    %759 = vmatpush1.msra.mxu0 0.0
    %760 = vmatprep.subr.mxu0 0.0
    %761 = vmatpush1.msra.mxu0 0.0
    %762 = vmatprep.subr.mxu0 0.0
    %763 = vmatpush1.msra.mxu0 0.0
    %764 = vmatprep.subr.mxu0 0.0
    %765 = vmatpush1.msra.mxu0 0.0
    %766 = vmatprep.subr.mxu0 0.0
    %767 = vmatpush1.msra.mxu0 0.0
    %768 = vmatprep.mubr.f32.mxu0 0.0
    %769 = vmatmul.mubr.f32.gmra.mrb[0].mxu0 %v702
    %v770 = vpop.f32.mrb[0].mxu0
    %v771 = vadd.f32 %v698, %v770
    %v772 = vpop.f32.mrb[0].mxu0
    %773 = vdwg.mxu0
    %vm774 = vcmask 33792
    %775 = vst.msk [vmem:[#allocation2] sm:$0x3] %vm774, %v771
    // Predicated region
    $region34: #{textcnn_forward.1} parent=1 // pred_check
      _
    $region35: #{textcnn_forward.1} parent=1 // pred_check_branch
      %777 = sbr.rel (0) target = $region37
    $region36: #{textcnn_forward.1} parent=1 // pred_region
      %s779 = ssub.s32 32, 32
      %780 = vsyncadd [#allocation3], %s779
      %s782 = sshll.u32 [#allocation2], 4
      %s783 = int_to_ptr.vmem [resolvable:$true] %s782
      %785 = dma.vmem_to_hbm [thread:$0]  %s783, 32, %s8, [#allocation3]
    $region37: #{textcnn_forward.1} parent=1 // pred_fallthru
      _
    // Predicated region
    $region38: #{textcnn_forward.1} parent=1 // pred_check
      _
    $region39: #{textcnn_forward.1} parent=1 // pred_check_branch
      %787 = sbr.rel (0) target = $region41
    $region40: #{textcnn_forward.1} parent=1 // pred_region
      %788 = dma.done [#allocation3], 32
    $region41: #{textcnn_forward.1} parent=1 // pred_fallthru
      _
    %789 = vsyncpa [#allocation3], 1

</llo_original>
